<compile_context>
chip_gen: v7x
topology: tpu7x:2x2x1
jax: 0.10.0
libtpu: 0.0.40
codegen_flags: <defaults>
</compile_context>

<pallas_src>
import functools

import jax
import jax.numpy as jnp
from jax.experimental import pallas as pl
from jax.experimental.pallas import tpu as pltpu


def _se_pool_gate_kernel(x_ref, w1_ref, w2_ref, gate_ref, acc_ref, *, hw, tile):
    """Phase 1: streamed global-average-pool; gate FCs run once at finalize."""
    # x_ref   : (1, C, tile) f32  streamed spatial tile of one batch element
    # w1_ref  : (C, C//r)    f32  Linear1 weight, (in, out) layout -- resident
    # w2_ref  : (C//r, C)    f32  Linear2 weight, (in, out) layout -- resident
    # gate_ref: (1, 1, C)    f32  per-(batch, channel) gate, written at finalize
    # acc_ref : (1, C)       f32  VMEM scratch: running spatial sum
    s = pl.program_id(1)

    @pl.when(s == 0)
    def _init():
        acc_ref[...] = jnp.zeros_like(acc_ref)

    x = x_ref[...]
    if hw % tile != 0:
        # Mask out-of-range lanes of the trailing partial tile so they do not
        # pollute the pooled mean (their contents are unspecified).
        lane = jax.lax.broadcasted_iota(jnp.int32, x.shape, dimension=2)
        x = jnp.where(s * tile + lane < hw, x, 0.0)
    acc_ref[...] += jnp.sum(x, axis=-1)                                   # (1, C)

    @pl.when(s == pl.num_programs(1) - 1)
    def _finalize():
        # Divide by the true HW exactly once, then the two tiny FCs + sigmoid
        # (negligible work, once per batch element, off the streamed path).
        y = acc_ref[...] * (1.0 / hw)                                     # (1, C)
        h = jnp.dot(y, w1_ref[...], preferred_element_type=jnp.float32)   # (1, C//r)
        h = jnp.maximum(h, 0.0)
        g = jnp.dot(h, w2_ref[...], preferred_element_type=jnp.float32)   # (1, C)
        g = jax.nn.sigmoid(g)
        gate_ref[...] = g[:, None, :].astype(gate_ref.dtype)              # (1, 1, C)


def _se_scale_kernel(x_ref, gate_ref, o_ref):
    """Phase 2: lane-dense streamed scale, out = x * gate."""
    # x_ref: (1, C, tile); gate_ref: (1, C, 1); o_ref: (1, C, tile)
    o_ref[...] = x_ref[...] * gate_ref[...]


def _choose_spatial_tile(hw, c, itemsize, target_block_bytes=2 * 1024 * 1024,
                         max_lanes=2048):
    """Largest lane-dense spatial tile (multiple of 128) within the VMEM budget."""
    cap = (target_block_bytes // max(c * itemsize, 1)) // 128 * 128
    cap = max(128, min(max_lanes, cap))
    if hw <= cap:
        return hw                       # full extent: always a legal block dim
    if hw % 128 == 0:
        t = cap
        while t > 128 and hw % t != 0:  # prefer an even divisor -> no masked tail
            t -= 128
        if hw % t == 0:
            return t
    return cap                          # uneven: trailing tile masked in phase 1


def se_layer(x, w1_t, w2_t):
    """SE forward.

    x    : (B, C, H, W) f32
    w1_t : (C, C//r) f32 -- Linear1 weight pre-transposed to (in, out)
    w2_t : (C//r, C) f32 -- Linear2 weight pre-transposed to (in, out)
    """
    B, C, H, W = x.shape
    HW = H * W
    x_flat = x.reshape(B, C, HW)
    tile = _choose_spatial_tile(HW, C, x.dtype.itemsize)
    n_sp = pl.cdiv(HW, tile)
    vmem_limit = 32 * 1024 * 1024  # explicit: above v5e's 16 MiB default, well
                                   # within v7x's 64 MiB physical VMEM

    # ---- phase 1: streamed spatial-sum reduction -> per-(B, C) gate --------
    gate = pl.pallas_call(
        functools.partial(_se_pool_gate_kernel, hw=HW, tile=tile),
        out_shape=jax.ShapeDtypeStruct((B, 1, C), jnp.float32),
        grid=(B, n_sp),
        in_specs=[
            pl.BlockSpec((1, C, tile), lambda b, s: (b, 0, s)),
            pl.BlockSpec(w1_t.shape, lambda b, s: (0, 0)),
            pl.BlockSpec(w2_t.shape, lambda b, s: (0, 0)),
        ],
        out_specs=pl.BlockSpec((1, 1, C), lambda b, s: (b, 0, 0)),
        scratch_shapes=[pltpu.VMEM((1, C), jnp.float32)],
        compiler_params=pltpu.CompilerParams(
            dimension_semantics=("parallel", "arbitrary"),
            vmem_limit_bytes=vmem_limit,
        ),
    )(x_flat, w1_t, w2_t)

    # (B, 1, C) -> (B, C, 1): pure metadata reshape (middle dim is 1) so the
    # scale kernel can broadcast the gate along the dense lane axis.
    gate_col = gate.reshape(B, C, 1)

    # ---- phase 2: streamed lane-dense scale  out = x * gate ----------------
    out_flat = pl.pallas_call(
        _se_scale_kernel,
        out_shape=jax.ShapeDtypeStruct((B, C, HW), x.dtype),
        grid=(B, n_sp),
        in_specs=[
            pl.BlockSpec((1, C, tile), lambda b, s: (b, 0, s)),
            pl.BlockSpec((1, C, 1), lambda b, s: (b, 0, 0)),
        ],
        out_specs=pl.BlockSpec((1, C, tile), lambda b, s: (b, 0, s)),
        compiler_params=pltpu.CompilerParams(
            dimension_semantics=("parallel", "parallel"),
            vmem_limit_bytes=vmem_limit,
        ),
    )(x_flat, gate_col)

    return out_flat.reshape(B, C, H, W)


def se_layer_ref(x, w1, w2):
    """Pure-JAX reference mirroring the PyTorch module (weights in (out, in))."""
    y = jnp.mean(x, axis=(2, 3))                       # (B, C)
    y = jnp.maximum(y @ w1.T, 0.0)                     # (B, C//r)
    y = jax.nn.sigmoid(y @ w2.T)                       # (B, C)
    return x * y[:, :, None, None]


# TODO(synk): the PFN/RPN/head TensorRT engines and the pycuda pillar scatter in PointPillars_v0.forward are opaque GPU binaries with no Pallas equivalent; only the SE gating block is implemented here.


if __name__ == "__main__":
    key = jax.random.PRNGKey(0)
    se_forward = jax.jit(se_layer)

    # (B, C, H, W): single-tile case, even multi-tile case, and a case whose
    # flattened spatial size is NOT a multiple of the tile (masked tail path).
    shapes = [(2, 64, 16, 16), (2, 64, 64, 64), (1, 64, 40, 52)]
    reduction = 16

    ok = True
    for B, C, H, W in shapes:
        hidden = C // reduction
        kx, k1, k2, key = jax.random.split(key, 4)
        x = jax.random.normal(kx, (B, C, H, W), dtype=jnp.float32)
        # PyTorch Linear layout: (out_features, in_features)
        w1 = jax.random.normal(k1, (hidden, C), dtype=jnp.float32) * 0.1
        w2 = jax.random.normal(k2, (C, hidden), dtype=jnp.float32) * 0.1
        # Pre-transpose the (static) weights once, outside the jitted call.
        w1_t = jnp.transpose(w1)   # (C, hidden)
        w2_t = jnp.transpose(w2)   # (hidden, C)

        out = jax.block_until_ready(se_forward(x, w1_t, w2_t))
        ref = se_layer_ref(x, w1, w2)
        assert out.shape == (B, C, H, W)
        if not jnp.allclose(out, ref, atol=1e-4, rtol=1e-4):
            ok = False
            print(f"mismatch at {(B, C, H, W)}: "
                  f"max abs err = {jnp.max(jnp.abs(out - ref))}")

    assert ok, "mismatch vs reference"
    print("KERNEL_OK")
</pallas_src>

<mosaic_0001>
module attributes {stable_mosaic.version = 11 : i64} {
  func.func @_se_pool_gate_kernel(%arg0: i32, %arg1: i32, %arg2: memref<1x64x256xf32, #tpu.memory_space<vmem>>, %arg3: memref<64x4xf32, #tpu.memory_space<vmem>>, %arg4: memref<4x64xf32, #tpu.memory_space<vmem>>, %arg5: memref<1x1x64xf32, #tpu.memory_space<vmem>>, %arg6: memref<1x64xf32, #tpu.memory_space<vmem>>) attributes {dimension_semantics = [#tpu.dimension_semantics<parallel>, #tpu.dimension_semantics<arbitrary>], iteration_bounds = array<i64: 2, 1>, scalar_prefetch = 0 : i64, scratch_operands = 1 : i64, tpu.core_type = #tpu.core_type<tc>, window_params = [{transform_indices = @transform_0, window_bounds = array<i64: 1, 64, 256>}, {pipeline_mode = #tpu.pipeline_mode<synchronous>, transform_indices = @transform_1, window_bounds = array<i64: 64, 4>}, {pipeline_mode = #tpu.pipeline_mode<synchronous>, transform_indices = @transform_2, window_bounds = array<i64: 4, 64>}, {transform_indices = @transform_3, window_bounds = array<i64: 1, 1, 64>}]} {
    %c0_i32 = arith.constant 0 : i32
    %0 = arith.cmpi eq, %arg1, %c0_i32 : i32
    %1 = arith.extui %0 : i1 to i32
    %c0_i32_0 = arith.constant 0 : i32
    %2 = arith.cmpi ne, %1, %c0_i32_0 : i32
    scf.if %2 {
      %cst_9 = arith.constant 0.000000e+00 : f32
      %11 = vector.broadcast %cst_9 : f32 to vector<1x64xf32>
      %c0_10 = arith.constant 0 : index
      %c0_11 = arith.constant 0 : index
      %12 = vector.load %arg6[%c0_10, %c0_11] : memref<1x64xf32, #tpu.memory_space<vmem>>, vector<1x64xf32>
      tpu.vector_store %arg6[%c0_10, %c0_11], %11 {strides = array<i32>} : memref<1x64xf32, #tpu.memory_space<vmem>>, vector<1x64xf32>,
    } else {
    }
    %c0 = arith.constant 0 : index
    %c0_1 = arith.constant 0 : index
    %c0_2 = arith.constant 0 : index
    %3 = vector.load %arg2[%c0, %c0_1, %c0_2] : memref<1x64x256xf32, #tpu.memory_space<vmem>>, vector<1x64x256xf32>
    %c0_3 = arith.constant 0 : index
    %c0_4 = arith.constant 0 : index
    %4 = vector.load %arg6[%c0_3, %c0_4] : memref<1x64xf32, #tpu.memory_space<vmem>>, vector<1x64xf32>
    %cst = arith.constant dense<0.000000e+00> : vector<1x64xf32>
    %5 = vector.multi_reduction <add>, %3, %cst [2] : vector<1x64x256xf32> to vector<1x64xf32>
    %6 = arith.addf %4, %5 : vector<1x64xf32>
    %c0_5 = arith.constant 0 : index
    %c0_6 = arith.constant 0 : index
    %7 = vector.load %arg6[%c0_5, %c0_6] : memref<1x64xf32, #tpu.memory_space<vmem>>, vector<1x64xf32>
    tpu.vector_store %arg6[%c0_5, %c0_6], %6 {strides = array<i32>} : memref<1x64xf32, #tpu.memory_space<vmem>>, vector<1x64xf32>,
    %c0_i32_7 = arith.constant 0 : i32
    %8 = arith.cmpi eq, %arg1, %c0_i32_7 : i32
    %9 = arith.extui %8 : i1 to i32
    %c0_i32_8 = arith.constant 0 : i32
    %10 = arith.cmpi ne, %9, %c0_i32_8 : i32
    scf.if %10 {
      %c0_9 = arith.constant 0 : index
      %c0_10 = arith.constant 0 : index
      %11 = vector.load %arg6[%c0_9, %c0_10] : memref<1x64xf32, #tpu.memory_space<vmem>>, vector<1x64xf32>
      %cst_11 = arith.constant 3.906250e-03 : f32
      %12 = vector.broadcast %cst_11 : f32 to vector<1x64xf32>
      %13 = arith.mulf %11, %12 : vector<1x64xf32>
      %c0_12 = arith.constant 0 : index
      %c0_13 = arith.constant 0 : index
      %14 = vector.load %arg3[%c0_12, %c0_13] : memref<64x4xf32, #tpu.memory_space<vmem>>, vector<64x4xf32>
      %cst_14 = arith.constant dense<0.000000e+00> : vector<1x4xf32>
      %15 = tpu.matmul %13, %14, %cst_14 {dimension_numbers = #tpu.dot_dimension_numbers<[1], [0], [0], [1], [0, 0, 1, 1], [], []>} : vector<1x64xf32>, vector<64x4xf32>, vector<1x4xf32> -> vector<1x4xf32>
      %cst_15 = arith.constant 0.000000e+00 : f32
      %16 = vector.broadcast %cst_15 : f32 to vector<1x4xf32>
      %17 = arith.maximumf %15, %16 : vector<1x4xf32>
      %c0_16 = arith.constant 0 : index
      %c0_17 = arith.constant 0 : index
      %18 = vector.load %arg4[%c0_16, %c0_17] : memref<4x64xf32, #tpu.memory_space<vmem>>, vector<4x64xf32>
      %cst_18 = arith.constant dense<0.000000e+00> : vector<1x64xf32>
      %19 = tpu.matmul %17, %18, %cst_18 {dimension_numbers = #tpu.dot_dimension_numbers<[1], [0], [0], [1], [0, 0, 1, 1], [], []>} : vector<1x4xf32>, vector<4x64xf32>, vector<1x64xf32> -> vector<1x64xf32>
      %20 = arith.negf %19 : vector<1x64xf32>
      %21 = math.exp %20 : vector<1x64xf32>
      %cst_19 = arith.constant 1.000000e+00 : f32
      %22 = vector.broadcast %cst_19 : f32 to vector<1x64xf32>
      %23 = arith.addf %22, %21 : vector<1x64xf32>
      %24 = arith.divf %22, %23 : vector<1x64xf32>
      %25 = vector.shape_cast %24 : vector<1x64xf32> to vector<1x1x64xf32>
      %c0_20 = arith.constant 0 : index
      %c0_21 = arith.constant 0 : index
      %c0_22 = arith.constant 0 : index
      %26 = vector.load %arg5[%c0_20, %c0_21, %c0_22] : memref<1x1x64xf32, #tpu.memory_space<vmem>>, vector<1x1x64xf32>
      tpu.vector_store %arg5[%c0_20, %c0_21, %c0_22], %25 {strides = array<i32>} : memref<1x1x64xf32, #tpu.memory_space<vmem>>, vector<1x1x64xf32>,
    } else {
    }
    return
  }
  func.func @transform_0(%arg0: i32, %arg1: i32) -> (i32, i32, i32) {
    %c0_i32 = arith.constant 0 : i32
    %c0_i32_0 = arith.constant 0 : i32
    return %arg0, %c0_i32, %arg1 : i32, i32, i32
  }
  func.func @transform_1(%arg0: i32, %arg1: i32) -> (i32, i32) {
    %c0_i32 = arith.constant 0 : i32
    %c0_i32_0 = arith.constant 0 : i32
    %c0_i32_1 = arith.constant 0 : i32
    return %c0_i32, %c0_i32_0 : i32, i32
  }
  func.func @transform_2(%arg0: i32, %arg1: i32) -> (i32, i32) {
    %c0_i32 = arith.constant 0 : i32
    %c0_i32_0 = arith.constant 0 : i32
    %c0_i32_1 = arith.constant 0 : i32
    return %c0_i32, %c0_i32_0 : i32, i32
  }
  func.func @transform_3(%arg0: i32, %arg1: i32) -> (i32, i32, i32) {
    %c0_i32 = arith.constant 0 : i32
    %c0_i32_0 = arith.constant 0 : i32
    %c0_i32_1 = arith.constant 0 : i32
    return %arg0, %c0_i32, %c0_i32_0 : i32, i32, i32
  }
}

module attributes {stable_mosaic.version = 11 : i64} {
  func.func @_se_scale_kernel(%arg0: i32, %arg1: i32, %arg2: memref<1x64x256xf32, #tpu.memory_space<vmem>>, %arg3: memref<1x64x1xf32, #tpu.memory_space<vmem>>, %arg4: memref<1x64x256xf32, #tpu.memory_space<vmem>>) attributes {dimension_semantics = [#tpu.dimension_semantics<parallel>, #tpu.dimension_semantics<parallel>], iteration_bounds = array<i64: 2, 1>, scalar_prefetch = 0 : i64, scratch_operands = 0 : i64, tpu.core_type = #tpu.core_type<tc>, window_params = [{transform_indices = @transform_0, window_bounds = array<i64: 1, 64, 256>}, {transform_indices = @transform_1, window_bounds = array<i64: 1, 64, 1>}, {transform_indices = @transform_2, window_bounds = array<i64: 1, 64, 256>}]} {
    %c0 = arith.constant 0 : index
    %c0_0 = arith.constant 0 : index
    %c0_1 = arith.constant 0 : index
    %0 = vector.load %arg2[%c0, %c0_0, %c0_1] : memref<1x64x256xf32, #tpu.memory_space<vmem>>, vector<1x64x256xf32>
    %c0_2 = arith.constant 0 : index
    %c0_3 = arith.constant 0 : index
    %c0_4 = arith.constant 0 : index
    %1 = vector.load %arg3[%c0_2, %c0_3, %c0_4] : memref<1x64x1xf32, #tpu.memory_space<vmem>>, vector<1x64x1xf32>
    %2 = vector.broadcast %1 : vector<1x64x1xf32> to vector<1x64x256xf32>
    %3 = arith.mulf %0, %2 : vector<1x64x256xf32>
    %c0_5 = arith.constant 0 : index
    %c0_6 = arith.constant 0 : index
    %c0_7 = arith.constant 0 : index
    %4 = vector.load %arg4[%c0_5, %c0_6, %c0_7] : memref<1x64x256xf32, #tpu.memory_space<vmem>>, vector<1x64x256xf32>
    tpu.vector_store %arg4[%c0_5, %c0_6, %c0_7], %3 {strides = array<i32>} : memref<1x64x256xf32, #tpu.memory_space<vmem>>, vector<1x64x256xf32>,
    return
  }
  func.func @transform_0(%arg0: i32, %arg1: i32) -> (i32, i32, i32) {
    %c0_i32 = arith.constant 0 : i32
    %c0_i32_0 = arith.constant 0 : i32
    return %arg0, %c0_i32, %arg1 : i32, i32, i32
  }
  func.func @transform_1(%arg0: i32, %arg1: i32) -> (i32, i32, i32) {
    %c0_i32 = arith.constant 0 : i32
    %c0_i32_0 = arith.constant 0 : i32
    %c0_i32_1 = arith.constant 0 : i32
    return %arg0, %c0_i32, %c0_i32_0 : i32, i32, i32
  }
  func.func @transform_2(%arg0: i32, %arg1: i32) -> (i32, i32, i32) {
    %c0_i32 = arith.constant 0 : i32
    %c0_i32_0 = arith.constant 0 : i32
    return %arg0, %c0_i32, %arg1 : i32, i32, i32
  }
}

</mosaic_0001>

<llo_original>
// kernel: se_layer.3
$region0: #{se_layer.3}
  #allocation0 [shape = 'u32[]', space=smem, size = 0x4, offset = 0x4, fixed_abs, tag = 'smem constant byte address 0x4 - core index']
  #allocation1 [shape = 'u32[144,128]{1,0:T(1,128)}', space=vmem, size = 0x12000, scoped, tag = 'internal scratch']
  %s0 = inlined_call_operand.vmem [shape: f32[2,64,256], index: 0, kind: input, shape index: {}]
  %s1 = inlined_call_operand.vmem [shape: f32[2,64,1], index: 1, kind: input, shape index: {}]
  %s2 = inlined_call_operand.vmem [shape: f32[2,64,256], index: 2, kind: output, shape index: {}]
  %s3 = sld [smem:[#allocation0]]
  $region41: #{se_layer.3} parent=0
    _
  %s5 = ssub.s32 1, %s3
  %s6 = scalar_select 0, %s5, %s3
  loop: start=0, step=1, limit=4
  $region2: #{se_layer.3} parent=0 // loop_pre_header
    _
  $region3: #{se_layer.3} parent=0 // loop_header
    %s8 = sphi 0, %s12
    %p9 = scmp.ge.s32.totalorder %s8, 4
    %s15 = sphi 0, %s27
    %s16 = sphi 0, %s23
    %s17 = sphi 0, %s15
    %s18 = sphi 0, %s16
    %s19 = sphi 0, %s17
    %s20 = sphi 0, %s18
    %s32 = sphi 0, %s34
    %s35 = sphi 0, %s32
    %s36 = sphi 0, %s35
    %s52 = sphi 0, %s36
    %s58 = sphi 0, %s60
    %s61 = sphi 0, %s58
    %s62 = sphi 0, %s61
    %s78 = sphi 0, %s62
    %s86 = sphi 0, %s88
    %s89 = sphi 0, %s86
    %s90 = sphi 0, %s89
    %s106 = sphi 0, %s90
  $region4: #{se_layer.3} parent=0 // loop_header_branch
    %11 = sbr.rel (%p9) target = $region8
  $region5: #{se_layer.3} parent=0 // loop_body
    %s13 = ssub.s32 %s8, 1
    %s14 = ssub.s32 %s8, 2
    %s21 = sadd.s32 1, %s16
    %p22 = scmp.ge.s32.totalorder %s21, 1
    %s23 = scalar_select %p22, 0, %s21
    %s24 = sadd.s32 1, %s15
    %s25 = scalar_select %p22, %s24, %s15
    %p26 = scmp.ge.s32.totalorder %s25, 2
    %s27 = scalar_select %p26, 0, %s25
    %s28 = ssub.s32 %s15, %s27
    %s29 = ssub.s32 %s16, %s23
    %s30 = sor.u32 %s28, %s29
    %p31 = scmp.eq.s32.totalorder %s30, 0
    %s33 = sadd.s32 %s32, 1
    %s34 = scalar_select %p31, %s32, %s33
    %p37 = pneg %p31
    %p38 = scmp.eq.s32.totalorder %s8, 1
    %p39 = por %p37, %p38
    %p40 = scmp.ne.s32.totalorder %s32, %s35
    %p41 = scmp.eq.s32.totalorder %s8, 0
    %p42 = por %p40, %p41
    %p43 = scmp.ne.s32.totalorder %s32, %s35
    %p44 = scmp.eq.s32.totalorder %s13, 1
    %p45 = por %p43, %p44
    %p46 = scmp.ne.s32.totalorder %s35, %s36
    %p47 = scmp.eq.s32.totalorder %s13, 0
    %p48 = por %p46, %p47
    %p49 = scmp.ne.s32.totalorder %s35, %s36
    %p50 = scmp.eq.s32.totalorder %s14, 1
    %p51 = por %p49, %p50
    %p53 = scmp.ne.s32.totalorder %s36, %s52
    %p54 = scmp.eq.s32.totalorder %s14, 0
    %p55 = por %p53, %p54
    %s56 = ssub.s32 %s15, %s27
    %p57 = scmp.eq.s32.totalorder %s56, 0
    %s59 = sadd.s32 %s58, 1
    %s60 = scalar_select %p57, %s58, %s59
    %p63 = pneg %p57
    %p64 = scmp.eq.s32.totalorder %s8, 1
    %p65 = por %p63, %p64
    %p66 = scmp.ne.s32.totalorder %s58, %s61
    %p67 = scmp.eq.s32.totalorder %s8, 0
    %p68 = por %p66, %p67
    %p69 = scmp.ne.s32.totalorder %s58, %s61
    %p70 = scmp.eq.s32.totalorder %s13, 1
    %p71 = por %p69, %p70
    %p72 = scmp.ne.s32.totalorder %s61, %s62
    %p73 = scmp.eq.s32.totalorder %s13, 0
    %p74 = por %p72, %p73
    %p75 = scmp.ne.s32.totalorder %s61, %s62
    %p76 = scmp.eq.s32.totalorder %s14, 1
    %p77 = por %p75, %p76
    %p79 = scmp.ne.s32.totalorder %s62, %s78
    %p80 = scmp.eq.s32.totalorder %s14, 0
    %p81 = por %p79, %p80
    %s82 = ssub.s32 %s15, %s27
    %s83 = ssub.s32 %s16, %s23
    %s84 = sor.u32 %s82, %s83
    %p85 = scmp.eq.s32.totalorder %s84, 0
    %s87 = sadd.s32 %s86, 1
    %s88 = scalar_select %p85, %s86, %s87
    %p91 = pneg %p85
    %p92 = scmp.eq.s32.totalorder %s8, 1
    %p93 = por %p91, %p92
    %p94 = scmp.ne.s32.totalorder %s86, %s89
    %p95 = scmp.eq.s32.totalorder %s8, 0
    %p96 = por %p94, %p95
    %p97 = scmp.ne.s32.totalorder %s86, %s89
    %p98 = scmp.eq.s32.totalorder %s13, 1
    %p99 = por %p97, %p98
    %p100 = scmp.ne.s32.totalorder %s89, %s90
    %p101 = scmp.eq.s32.totalorder %s13, 0
    %p102 = por %p100, %p101
    %p103 = scmp.ne.s32.totalorder %s89, %s90
    %p104 = scmp.eq.s32.totalorder %s14, 1
    %p105 = por %p103, %p104
    %p107 = scmp.ne.s32.totalorder %s90, %s106
    %p108 = scmp.eq.s32.totalorder %s14, 0
    %p109 = por %p107, %p108
    %p110 = scmp.le.s32.totalorder 1, %s8
    %p111 = scmp.lt.s32.totalorder %s8, 3
    %p112 = pnand %p110, %p111
    %p113 = pneg %p112
    // Predicated region
    $region9: #{se_layer.3} parent=5 // pred_check
      _
    $region10: #{se_layer.3} parent=5 // pred_check_branch
      %115 = sbr.rel (%p112) target = $region12
    $region11: #{se_layer.3} parent=5 // pred_region
      %s116 = ssub.s32 %s8, 1
    $region12: #{se_layer.3} parent=5 // pred_fallthru
      _
    %p117 = scmp.lt.s32.totalorder %s8, 2
    // Predicated region
    $region13: #{se_layer.3} parent=5 // pred_check
      %p118 = pneg %p117
    $region14: #{se_layer.3} parent=5 // pred_check_branch
      %120 = sbr.rel (%p118) target = $region16
    $region15: #{se_layer.3} parent=5 // pred_region
      // Predicated region
      $region17: #{se_layer.3} parent=15 // pred_check
        %p121 = pneg %p42
      $region18: #{se_layer.3} parent=15 // pred_check_branch
        %123 = sbr.rel (%p121) target = $region20
      $region19: #{se_layer.3} parent=15 // pred_region
        %s124 = smul.u32 2, %s16
        %p125 = scmp.lt.s32.totalorder %s15, 1
        %s126 = scalar_select %p125, %s15, 1
        %p127 = scmp.lt.s32.totalorder %s124, 1
        %s128 = scalar_select %p127, %s124, 1
        %s129 = smul.addr %s126, 16
        %s130 = sadd.s32 %s128, %s129
        %s131 = smul.addr %s130, 8
        %s132 = scalar_lea.vmem %s0, %s131
        %s133 = smul.u32 2, %s16
      $region20: #{se_layer.3} parent=15 // pred_fallthru
        _
      // Predicated region
      $region21: #{se_layer.3} parent=15 // pred_check
        %p134 = pneg %p68
      $region22: #{se_layer.3} parent=15 // pred_check_branch
        %136 = sbr.rel (%p134) target = $region24
      $region23: #{se_layer.3} parent=15 // pred_region
        %p137 = scmp.lt.s32.totalorder %s15, 1
        %s138 = scalar_select %p137, %s15, 1
        %s139 = smul.addr %s138, 8
        %s140 = smul.addr %s139, 8
        %s141 = scalar_lea.vmem %s1, %s140
      $region24: #{se_layer.3} parent=15 // pred_fallthru
        _
    $region16: #{se_layer.3} parent=5 // pred_fallthru
      _
    %p142 = scmp.le.s32.totalorder 1, %s8
    %p143 = scmp.lt.s32.totalorder %s8, 3
    %p144 = pnand %p142, %p143
    %p145 = pneg %p144
    // Predicated region
    $region25: #{se_layer.3} parent=5 // pred_check
      _
    $region26: #{se_layer.3} parent=5 // pred_check_branch
      %147 = sbr.rel (%p144) target = $region28
    $region27: #{se_layer.3} parent=5 // pred_region
      %s148 = ssub.s32 %s8, 1
      %s149 = smul.u32 2, %s18
      %p150 = scmp.lt.s32.totalorder %s17, 1
      %s151 = scalar_select %p150, %s17, 1
      %p152 = scmp.lt.s32.totalorder %s149, 1
      %s153 = scalar_select %p152, %s149, 1
      %s154 = smul.addr %s151, 16
      %s155 = sadd.s32 %s153, %s154
      %s156 = smul.addr %s155, 8
      %s157 = scalar_lea.vmem %s0, %s156
      %p158 = pneg %p48
      %p159 = pneg %p45
      %p160 = scmp.lt.s32.totalorder %s17, 1
      %s161 = scalar_select %p160, %s17, 1
      %s162 = smul.addr %s161, 8
      %s163 = smul.addr %s162, 8
      %s164 = scalar_lea.vmem %s1, %s163
      %p165 = pneg %p74
      %p166 = pneg %p71
      %p167 = pneg %p102
      %p168 = pneg %p99
      %s169 = smul.u32 2, %s18
      %p170 = scmp.lt.s32.totalorder %s17, 1
      %s171 = scalar_select %p170, %s17, 1
      %p172 = scmp.lt.s32.totalorder %s169, 1
      %s173 = scalar_select %p172, %s169, 1
      %s174 = smul.addr %s171, 16
      %s175 = sadd.s32 %s173, %s174
      %s176 = smul.addr %s175, 8
      %s177 = scalar_lea.vmem %s2, %s176
      %s178 = smul.u32 2, %s18
      %p179 = scmp.lt.s32.totalorder %s17, 1
      %s180 = scalar_select %p179, %s17, 1
      %p181 = scmp.lt.s32.totalorder %s178, 1
      %s182 = scalar_select %p181, %s178, 1
      %s183 = smul.addr %s180, 16
      %s184 = sadd.s32 %s182, %s183
      %s185 = smul.addr %s184, 8
      %s186 = scalar_lea.vmem %s0, %s185
      %s187 = smul.u32 2, %s18
      %p188 = scmp.lt.s32.totalorder %s17, 1
      %s189 = scalar_select %p188, %s17, 1
      %s190 = smul.addr %s189, 8
      %s191 = smul.addr %s190, 8
      %s192 = scalar_lea.vmem %s1, %s191
      %s193 = smul.u32 2, %s18
      %p194 = scmp.lt.s32.totalorder %s17, 1
      %s195 = scalar_select %p194, %s17, 1
      %p196 = scmp.lt.s32.totalorder %s193, 1
      %s197 = scalar_select %p196, %s193, 1
      %s198 = smul.addr %s195, 16
      %s199 = sadd.s32 %s197, %s198
      %s200 = smul.addr %s199, 8
      %s201 = scalar_lea.vmem %s2, %s200
      %s202 = smul.u32 2, %s18
      %v203 = vld [vmem:[%s186] sm:$0xff]
      %v204 = vld [vmem:[%s186 + $0x8] sm:$0xff]
      %v205 = vld [vmem:[%s186 + $0x10] sm:$0xff]
      %v206 = vld [vmem:[%s186 + $0x18] sm:$0xff]
      %v207 = vld [vmem:[%s186 + $0x20] sm:$0xff]
      %v208 = vld [vmem:[%s186 + $0x28] sm:$0xff]
      %v209 = vld [vmem:[%s186 + $0x30] sm:$0xff]
      %v210 = vld [vmem:[%s186 + $0x38] sm:$0xff]
      %v211 = vld [vmem:[%s186 + $0x40] sm:$0xff]
      %v212 = vld [vmem:[%s186 + $0x48] sm:$0xff]
      %v213 = vld [vmem:[%s186 + $0x50] sm:$0xff]
      %v214 = vld [vmem:[%s186 + $0x58] sm:$0xff]
      %v215 = vld [vmem:[%s186 + $0x60] sm:$0xff]
      %v216 = vld [vmem:[%s186 + $0x68] sm:$0xff]
      %v217 = vld [vmem:[%s186 + $0x70] sm:$0xff]
      %v218 = vld [vmem:[%s186 + $0x78] sm:$0xff]
      %v219 = vld [vmem:[%s192] sm:$0xff]
      %v220 = vld [vmem:[%s192 + $0x8] sm:$0xff]
      %v221 = vld [vmem:[%s192 + $0x10] sm:$0xff]
      %v222 = vld [vmem:[%s192 + $0x18] sm:$0xff]
      %v223 = vld [vmem:[%s192 + $0x20] sm:$0xff]
      %v224 = vld [vmem:[%s192 + $0x28] sm:$0xff]
      %v225 = vld [vmem:[%s192 + $0x30] sm:$0xff]
      %v226 = vld [vmem:[%s192 + $0x38] sm:$0xff]
      %228 = vset.pattern.permute.xlu0 0
      %229 = vperm.xlu0 %228, %v219
      %v230 = vpop.permute.xlu0 %229
      %233 = vset.pattern.permute.xlu0 0
      %234 = vperm.xlu0 %233, %v220
      %v235 = vpop.permute.xlu0 %234
      %238 = vset.pattern.permute.xlu0 0
      %239 = vperm.xlu0 %238, %v221
      %v240 = vpop.permute.xlu0 %239
      %243 = vset.pattern.permute.xlu0 0
      %244 = vperm.xlu0 %243, %v222
      %v245 = vpop.permute.xlu0 %244
      %248 = vset.pattern.permute.xlu0 0
      %249 = vperm.xlu0 %248, %v223
      %v250 = vpop.permute.xlu0 %249
      %253 = vset.pattern.permute.xlu0 0
      %254 = vperm.xlu0 %253, %v224
      %v255 = vpop.permute.xlu0 %254
      %258 = vset.pattern.permute.xlu0 0
      %259 = vperm.xlu0 %258, %v225
      %v260 = vpop.permute.xlu0 %259
      %263 = vset.pattern.permute.xlu0 0
      %264 = vperm.xlu0 %263, %v226
      %v265 = vpop.permute.xlu0 %264
      %v267 = vmul.f32 %v203, %v230
      %v268 = vmul.f32 %v204, %v230
      %v269 = vmul.f32 %v205, %v235
      %v270 = vmul.f32 %v206, %v235
      %v271 = vmul.f32 %v207, %v240
      %v272 = vmul.f32 %v208, %v240
      %v273 = vmul.f32 %v209, %v245
      %v274 = vmul.f32 %v210, %v245
      %v275 = vmul.f32 %v211, %v250
      %v276 = vmul.f32 %v212, %v250
      %v277 = vmul.f32 %v213, %v255
      %v278 = vmul.f32 %v214, %v255
      %v279 = vmul.f32 %v215, %v260
      %v280 = vmul.f32 %v216, %v260
      %v281 = vmul.f32 %v217, %v265
      %v282 = vmul.f32 %v218, %v265
      %283 = vst [vmem:[%s201] sm:$0xff] %v267
      %284 = vst [vmem:[%s201 + $0x8] sm:$0xff] %v268
      %285 = vst [vmem:[%s201 + $0x10] sm:$0xff] %v269
      %286 = vst [vmem:[%s201 + $0x18] sm:$0xff] %v270
      %287 = vst [vmem:[%s201 + $0x20] sm:$0xff] %v271
      %288 = vst [vmem:[%s201 + $0x28] sm:$0xff] %v272
      %289 = vst [vmem:[%s201 + $0x30] sm:$0xff] %v273
      %290 = vst [vmem:[%s201 + $0x38] sm:$0xff] %v274
      %291 = vst [vmem:[%s201 + $0x40] sm:$0xff] %v275
      %292 = vst [vmem:[%s201 + $0x48] sm:$0xff] %v276
      %293 = vst [vmem:[%s201 + $0x50] sm:$0xff] %v277
      %294 = vst [vmem:[%s201 + $0x58] sm:$0xff] %v278
      %295 = vst [vmem:[%s201 + $0x60] sm:$0xff] %v279
      %296 = vst [vmem:[%s201 + $0x68] sm:$0xff] %v280
      %297 = vst [vmem:[%s201 + $0x70] sm:$0xff] %v281
      %298 = vst [vmem:[%s201 + $0x78] sm:$0xff] %v282
      %s299 = smul.u32 2, %s18
      %p300 = scmp.lt.s32.totalorder %s17, 1
      %s301 = scalar_select %p300, %s17, 1
      %p302 = scmp.lt.s32.totalorder %s299, 1
      %s303 = scalar_select %p302, %s299, 1
      %s304 = smul.addr %s301, 16
      %s305 = sadd.s32 %s303, %s304
      %s306 = smul.addr %s305, 8
      %s307 = scalar_lea.vmem %s2, %s306
      // Predicated region
      $region29: #{se_layer.3} parent=27 // pred_check
        %p308 = pneg %p99
      $region30: #{se_layer.3} parent=27 // pred_check_branch
        %310 = sbr.rel (%p308) target = $region32
      $region31: #{se_layer.3} parent=27 // pred_region
        %s311 = smul.u32 2, %s18
      $region32: #{se_layer.3} parent=27 // pred_fallthru
        _
    $region28: #{se_layer.3} parent=5 // pred_fallthru
      _
    %p312 = scmp.le.s32.totalorder 2, %s8
    // Predicated region
    $region33: #{se_layer.3} parent=5 // pred_check
      %p313 = pneg %p312
    $region34: #{se_layer.3} parent=5 // pred_check_branch
      %315 = sbr.rel (%p313) target = $region36
    $region35: #{se_layer.3} parent=5 // pred_region
      %s316 = ssub.s32 %s8, 2
      // Predicated region
      $region37: #{se_layer.3} parent=35 // pred_check
        %p317 = pneg %p105
      $region38: #{se_layer.3} parent=35 // pred_check_branch
        %319 = sbr.rel (%p317) target = $region40
      $region39: #{se_layer.3} parent=35 // pred_region
        %s320 = smul.u32 2, %s20
        %p321 = scmp.lt.s32.totalorder %s19, 1
        %s322 = scalar_select %p321, %s19, 1
        %p323 = scmp.lt.s32.totalorder %s320, 1
        %s324 = scalar_select %p323, %s320, 1
        %s325 = smul.addr %s322, 16
        %s326 = sadd.s32 %s324, %s325
        %s327 = smul.addr %s326, 8
        %s328 = scalar_lea.vmem %s2, %s327
      $region40: #{se_layer.3} parent=35 // pred_fallthru
        _
    $region36: #{se_layer.3} parent=5 // pred_fallthru
      _
  $region6: #{se_layer.3} parent=0 // loop_footer
    %s12 = sadd.s32 1, %s8
  $region7: #{se_layer.3} parent=0 // loop_footer_branch
    %7 = sbr.rel target = $region3
  $region8: #{se_layer.3} parent=0 // loop_exit
    _

// kernel: se_layer.2
$region0: #{se_layer.2}
  #allocation0 [shape = 'u32[]', space=smem, size = 0x4, offset = 0x4, fixed_abs, tag = 'smem constant byte address 0x4 - core index']
  #allocation1 [shape = 'u32[144,128]{1,0:T(1,128)}', space=vmem, size = 0x12000, scoped, tag = 'internal scratch']
  #allocation2 [shape = 'f32[1,64]{1,0:T(1,128)}', space=vmem, size = 0x200, scoped, tag = 'scratch operand']
  %s0 = inlined_call_operand.vmem [shape: f32[2,64,256], index: 0, kind: input, shape index: {}]
  %s1 = inlined_call_operand.vmem [shape: f32[64,4], index: 1, kind: input, shape index: {}]
  %s2 = inlined_call_operand.vmem [shape: f32[4,64], index: 2, kind: input, shape index: {}]
  %s3 = inlined_call_operand.vmem [shape: f32[2,1,64], index: 3, kind: output, shape index: {}]
  %s4 = sld [smem:[#allocation0]]
  $region53: #{se_layer.2} parent=0
    _
  %s6 = ssub.s32 1, %s4
  %s7 = scalar_select 0, %s6, %s4
  loop: start=0, step=1, limit=4
  $region2: #{se_layer.2} parent=0 // loop_pre_header
    _
  $region3: #{se_layer.2} parent=0 // loop_header
    %s9 = sphi 0, %s13
    %p10 = scmp.ge.s32.totalorder %s9, 4
    %s16 = sphi 0, %s28
    %s17 = sphi 0, %s24
    %s18 = sphi 0, %s16
    %s19 = sphi 0, %s17
    %s20 = sphi 0, %s18
    %s21 = sphi 0, %s19
    %s33 = sphi 0, %s35
    %s36 = sphi 0, %s33
    %s37 = sphi 0, %s36
    %s53 = sphi 0, %s37
    %s57 = sphi 0, %s57
    %s59 = sphi 0, %s57
    %s60 = sphi 0, %s59
    %s74 = sphi 0, %s60
    %s78 = sphi 0, %s78
    %s80 = sphi 0, %s78
    %s81 = sphi 0, %s80
    %s95 = sphi 0, %s81
    %s101 = sphi 0, %s103
    %s104 = sphi 0, %s101
    %s105 = sphi 0, %s104
    %s121 = sphi 0, %s105
  $region4: #{se_layer.2} parent=0 // loop_header_branch
    %12 = sbr.rel (%p10) target = $region8
  $region5: #{se_layer.2} parent=0 // loop_body
    %s14 = ssub.s32 %s9, 1
    %s15 = ssub.s32 %s9, 2
    %s22 = sadd.s32 1, %s17
    %p23 = scmp.ge.s32.totalorder %s22, 1
    %s24 = scalar_select %p23, 0, %s22
    %s25 = sadd.s32 1, %s16
    %s26 = scalar_select %p23, %s25, %s16
    %p27 = scmp.ge.s32.totalorder %s26, 2
    %s28 = scalar_select %p27, 0, %s26
    %s29 = ssub.s32 %s16, %s28
    %s30 = ssub.s32 %s17, %s24
    %s31 = sor.u32 %s29, %s30
    %p32 = scmp.eq.s32.totalorder %s31, 0
    %s34 = sadd.s32 %s33, 1
    %s35 = scalar_select %p32, %s33, %s34
    %p38 = pneg %p32
    %p39 = scmp.eq.s32.totalorder %s9, 1
    %p40 = por %p38, %p39
    %p41 = scmp.ne.s32.totalorder %s33, %s36
    %p42 = scmp.eq.s32.totalorder %s9, 0
    %p43 = por %p41, %p42
    %p44 = scmp.ne.s32.totalorder %s33, %s36
    %p45 = scmp.eq.s32.totalorder %s14, 1
    %p46 = por %p44, %p45
    %p47 = scmp.ne.s32.totalorder %s36, %s37
    %p48 = scmp.eq.s32.totalorder %s14, 0
    %p49 = por %p47, %p48
    %p50 = scmp.ne.s32.totalorder %s36, %s37
    %p51 = scmp.eq.s32.totalorder %s15, 1
    %p52 = por %p50, %p51
    %p54 = scmp.ne.s32.totalorder %s37, %s53
    %p55 = scmp.eq.s32.totalorder %s15, 0
    %p56 = por %p54, %p55
    %s58 = sadd.s32 %s57, 1
    %p61 = scmp.eq.s32.totalorder %s9, 1
    %p62 = scmp.ne.s32.totalorder %s57, %s59
    %p63 = scmp.eq.s32.totalorder %s9, 0
    %p64 = por %p62, %p63
    %p65 = scmp.ne.s32.totalorder %s57, %s59
    %p66 = scmp.eq.s32.totalorder %s14, 1
    %p67 = por %p65, %p66
    %p68 = scmp.ne.s32.totalorder %s59, %s60
    %p69 = scmp.eq.s32.totalorder %s14, 0
    %p70 = por %p68, %p69
    %p71 = scmp.ne.s32.totalorder %s59, %s60
    %p72 = scmp.eq.s32.totalorder %s15, 1
    %p73 = por %p71, %p72
    %p75 = scmp.ne.s32.totalorder %s60, %s74
    %p76 = scmp.eq.s32.totalorder %s15, 0
    %p77 = por %p75, %p76
    %s79 = sadd.s32 %s78, 1
    %p82 = scmp.eq.s32.totalorder %s9, 1
    %p83 = scmp.ne.s32.totalorder %s78, %s80
    %p84 = scmp.eq.s32.totalorder %s9, 0
    %p85 = por %p83, %p84
    %p86 = scmp.ne.s32.totalorder %s78, %s80
    %p87 = scmp.eq.s32.totalorder %s14, 1
    %p88 = por %p86, %p87
    %p89 = scmp.ne.s32.totalorder %s80, %s81
    %p90 = scmp.eq.s32.totalorder %s14, 0
    %p91 = por %p89, %p90
    %p92 = scmp.ne.s32.totalorder %s80, %s81
    %p93 = scmp.eq.s32.totalorder %s15, 1
    %p94 = por %p92, %p93
    %p96 = scmp.ne.s32.totalorder %s81, %s95
    %p97 = scmp.eq.s32.totalorder %s15, 0
    %p98 = por %p96, %p97
    %s99 = ssub.s32 %s16, %s28
    %p100 = scmp.eq.s32.totalorder %s99, 0
    %s102 = sadd.s32 %s101, 1
    %s103 = scalar_select %p100, %s101, %s102
    %p106 = pneg %p100
    %p107 = scmp.eq.s32.totalorder %s9, 1
    %p108 = por %p106, %p107
    %p109 = scmp.ne.s32.totalorder %s101, %s104
    %p110 = scmp.eq.s32.totalorder %s9, 0
    %p111 = por %p109, %p110
    %p112 = scmp.ne.s32.totalorder %s101, %s104
    %p113 = scmp.eq.s32.totalorder %s14, 1
    %p114 = por %p112, %p113
    %p115 = scmp.ne.s32.totalorder %s104, %s105
    %p116 = scmp.eq.s32.totalorder %s14, 0
    %p117 = por %p115, %p116
    %p118 = scmp.ne.s32.totalorder %s104, %s105
    %p119 = scmp.eq.s32.totalorder %s15, 1
    %p120 = por %p118, %p119
    %p122 = scmp.ne.s32.totalorder %s105, %s121
    %p123 = scmp.eq.s32.totalorder %s15, 0
    %p124 = por %p122, %p123
    %p125 = scmp.le.s32.totalorder 1, %s9
    %p126 = scmp.lt.s32.totalorder %s9, 3
    %p127 = pnand %p125, %p126
    %p128 = pneg %p127
    // Predicated region
    $region9: #{se_layer.2} parent=5 // pred_check
      _
    $region10: #{se_layer.2} parent=5 // pred_check_branch
      %130 = sbr.rel (%p127) target = $region12
    $region11: #{se_layer.2} parent=5 // pred_region
      %s131 = ssub.s32 %s9, 1
      // Predicated region
      $region13: #{se_layer.2} parent=11 // pred_check
        %p132 = pneg %p70
      $region14: #{se_layer.2} parent=11 // pred_check_branch
        %134 = sbr.rel (%p132) target = $region16
      $region15: #{se_layer.2} parent=11 // pred_region
        _
      $region16: #{se_layer.2} parent=11 // pred_fallthru
        _
      // Predicated region
      $region17: #{se_layer.2} parent=11 // pred_check
        %p135 = pneg %p91
      $region18: #{se_layer.2} parent=11 // pred_check_branch
        %137 = sbr.rel (%p135) target = $region20
      $region19: #{se_layer.2} parent=11 // pred_region
        _
      $region20: #{se_layer.2} parent=11 // pred_fallthru
        _
    $region12: #{se_layer.2} parent=5 // pred_fallthru
      _
    %p138 = scmp.lt.s32.totalorder %s9, 2
    // Predicated region
    $region21: #{se_layer.2} parent=5 // pred_check
      %p139 = pneg %p138
    $region22: #{se_layer.2} parent=5 // pred_check_branch
      %141 = sbr.rel (%p139) target = $region24
    $region23: #{se_layer.2} parent=5 // pred_region
      // Predicated region
      $region25: #{se_layer.2} parent=23 // pred_check
        %p142 = pneg %p43
      $region26: #{se_layer.2} parent=23 // pred_check_branch
        %144 = sbr.rel (%p142) target = $region28
      $region27: #{se_layer.2} parent=23 // pred_region
        %s145 = smul.u32 2, %s17
        %p146 = scmp.lt.s32.totalorder %s16, 1
        %s147 = scalar_select %p146, %s16, 1
        %p148 = scmp.lt.s32.totalorder %s145, 1
        %s149 = scalar_select %p148, %s145, 1
        %s150 = smul.addr %s147, 16
        %s151 = sadd.s32 %s149, %s150
        %s152 = smul.addr %s151, 8
        %s153 = scalar_lea.vmem %s0, %s152
        %s154 = smul.u32 2, %s17
      $region28: #{se_layer.2} parent=23 // pred_fallthru
        _
    $region24: #{se_layer.2} parent=5 // pred_fallthru
      _
    %p155 = scmp.le.s32.totalorder 1, %s9
    %p156 = scmp.lt.s32.totalorder %s9, 3
    %p157 = pnand %p155, %p156
    %p158 = pneg %p157
    // Predicated region
    $region29: #{se_layer.2} parent=5 // pred_check
      _
    $region30: #{se_layer.2} parent=5 // pred_check_branch
      %160 = sbr.rel (%p157) target = $region32
    $region31: #{se_layer.2} parent=5 // pred_region
      %s161 = ssub.s32 %s9, 1
      %s162 = smul.u32 2, %s19
      %p163 = scmp.lt.s32.totalorder %s18, 1
      %s164 = scalar_select %p163, %s18, 1
      %p165 = scmp.lt.s32.totalorder %s162, 1
      %s166 = scalar_select %p165, %s162, 1
      %s167 = smul.addr %s164, 16
      %s168 = sadd.s32 %s166, %s167
      %s169 = smul.addr %s168, 8
      %s170 = scalar_lea.vmem %s0, %s169
      %p171 = pneg %p49
      %p172 = pneg %p46
      %p173 = pneg %p70
      %p174 = pneg %p67
      %p175 = pneg %p91
      %p176 = pneg %p88
      %p177 = pneg %p117
      %p178 = pneg %p114
      %p179 = scmp.lt.s32.totalorder %s18, 1
      %s180 = scalar_select %p179, %s18, 1
      %s181 = scalar_lea.vmem %s3, %s180
      %s182 = smul.u32 2, %s19
      %p183 = scmp.lt.s32.totalorder %s18, 1
      %s184 = scalar_select %p183, %s18, 1
      %p185 = scmp.lt.s32.totalorder %s182, 1
      %s186 = scalar_select %p185, %s182, 1
      %s187 = smul.addr %s184, 16
      %s188 = sadd.s32 %s186, %s187
      %s189 = smul.addr %s188, 8
      %s190 = scalar_lea.vmem %s0, %s189
      %s191 = smul.u32 2, %s19
      %p192 = scmp.lt.s32.totalorder %s18, 1
      %s193 = scalar_select %p192, %s18, 1
      %s194 = scalar_lea.vmem %s3, %s193
      %p195 = scmp.eq.s32.totalorder %s19, 0
      // Predicated region
      $region33: #{se_layer.2} parent=31 // pred_check
        %p196 = pneg %p195
      $region34: #{se_layer.2} parent=31 // pred_check_branch
        %198 = sbr.rel (%p196) target = $region36
      $region35: #{se_layer.2} parent=31 // pred_region
        %vm199 = vcmask 516096
        %200 = vst.msk [vmem:[#allocation2] sm:$0x1] %vm199, 0.0
      $region36: #{se_layer.2} parent=31 // pred_fallthru
        _
      %v201 = vld [vmem:[%s190] sm:$0xff]
      %v202 = vld [vmem:[%s190 + $0x8] sm:$0xff]
      %v203 = vld [vmem:[%s190 + $0x10] sm:$0xff]
      %v204 = vld [vmem:[%s190 + $0x18] sm:$0xff]
      %v205 = vld [vmem:[%s190 + $0x20] sm:$0xff]
      %v206 = vld [vmem:[%s190 + $0x28] sm:$0xff]
      %v207 = vld [vmem:[%s190 + $0x30] sm:$0xff]
      %v208 = vld [vmem:[%s190 + $0x38] sm:$0xff]
      %v209 = vld [vmem:[%s190 + $0x40] sm:$0xff]
      %v210 = vld [vmem:[%s190 + $0x48] sm:$0xff]
      %v211 = vld [vmem:[%s190 + $0x50] sm:$0xff]
      %v212 = vld [vmem:[%s190 + $0x58] sm:$0xff]
      %v213 = vld [vmem:[%s190 + $0x60] sm:$0xff]
      %v214 = vld [vmem:[%s190 + $0x68] sm:$0xff]
      %v215 = vld [vmem:[%s190 + $0x70] sm:$0xff]
      %v216 = vld [vmem:[%s190 + $0x78] sm:$0xff]
      %v217 = vld [vmem:[#allocation2] sm:$0x1]
      %v218 = vadd.f32 %v201, %v202
      %219 = vadd.xlane.f32.xlu0 %v218
      %v220 = vpop.xlane.xlu0 %219
      %v221 = vadd.f32 %v203, %v204
      %222 = vadd.xlane.f32.xlu0 %v221
      %v223 = vpop.xlane.xlu0 %222
      %v224 = vadd.f32 %v205, %v206
      %225 = vadd.xlane.f32.xlu0 %v224
      %v226 = vpop.xlane.xlu0 %225
      %v227 = vadd.f32 %v207, %v208
      %228 = vadd.xlane.f32.xlu0 %v227
      %v229 = vpop.xlane.xlu0 %228
      %v230 = vadd.f32 %v209, %v210
      %231 = vadd.xlane.f32.xlu0 %v230
      %v232 = vpop.xlane.xlu0 %231
      %v233 = vadd.f32 %v211, %v212
      %234 = vadd.xlane.f32.xlu0 %v233
      %v235 = vpop.xlane.xlu0 %234
      %v236 = vadd.f32 %v213, %v214
      %237 = vadd.xlane.f32.xlu0 %v236
      %v238 = vpop.xlane.xlu0 %237
      %v239 = vadd.f32 %v215, %v216
      %240 = vadd.xlane.f32.xlu0 %v239
      %v241 = vpop.xlane.xlu0 %240
      %v250 = vlaneseq
      %v251 = vshrl.u32 %v250, 7
      %v252 = vsub.s32 0, %v251
      %v253 = vrot.slane %v220, %v252
      %v254 = vlaneseq
      %v255 = vshrl.u32 %v254, 7
      %v256 = vsub.s32 1, %v255
      %v257 = vrot.slane %v220, %v256
      %v258 = vlaneseq
      %v259 = vshrl.u32 %v258, 7
      %v260 = vsub.s32 2, %v259
      %v261 = vrot.slane %v220, %v260
      %v262 = vlaneseq
      %v263 = vshrl.u32 %v262, 7
      %v264 = vsub.s32 3, %v263
      %v265 = vrot.slane %v220, %v264
      %v266 = vlaneseq
      %v267 = vshrl.u32 %v266, 7
      %v268 = vsub.s32 4, %v267
      %v269 = vrot.slane %v220, %v268
      %v270 = vlaneseq
      %v271 = vshrl.u32 %v270, 7
      %v272 = vsub.s32 5, %v271
      %v273 = vrot.slane %v220, %v272
      %v274 = vlaneseq
      %v275 = vshrl.u32 %v274, 7
      %v276 = vsub.s32 6, %v275
      %v277 = vrot.slane %v220, %v276
      %v278 = vlaneseq
      %v279 = vshrl.u32 %v278, 7
      %v280 = vsub.s32 7, %v279
      %v281 = vrot.slane %v220, %v280
      %v282 = vlaneseq
      %v283 = vshrl.u32 %v282, 7
      %v284 = vsub.s32 0, %v283
      %v285 = vrot.slane %v223, %v284
      %v286 = vlaneseq
      %v287 = vshrl.u32 %v286, 7
      %v288 = vsub.s32 1, %v287
      %v289 = vrot.slane %v223, %v288
      %v290 = vlaneseq
      %v291 = vshrl.u32 %v290, 7
      %v292 = vsub.s32 2, %v291
      %v293 = vrot.slane %v223, %v292
      %v294 = vlaneseq
      %v295 = vshrl.u32 %v294, 7
      %v296 = vsub.s32 3, %v295
      %v297 = vrot.slane %v223, %v296
      %v298 = vlaneseq
      %v299 = vshrl.u32 %v298, 7
      %v300 = vsub.s32 4, %v299
      %v301 = vrot.slane %v223, %v300
      %v302 = vlaneseq
      %v303 = vshrl.u32 %v302, 7
      %v304 = vsub.s32 5, %v303
      %v305 = vrot.slane %v223, %v304
      %v306 = vlaneseq
      %v307 = vshrl.u32 %v306, 7
      %v308 = vsub.s32 6, %v307
      %v309 = vrot.slane %v223, %v308
      %v310 = vlaneseq
      %v311 = vshrl.u32 %v310, 7
      %v312 = vsub.s32 7, %v311
      %v313 = vrot.slane %v223, %v312
      %v314 = vlaneseq
      %v315 = vshrl.u32 %v314, 7
      %v316 = vsub.s32 0, %v315
      %v317 = vrot.slane %v226, %v316
      %v318 = vlaneseq
      %v319 = vshrl.u32 %v318, 7
      %v320 = vsub.s32 1, %v319
      %v321 = vrot.slane %v226, %v320
      %v322 = vlaneseq
      %v323 = vshrl.u32 %v322, 7
      %v324 = vsub.s32 2, %v323
      %v325 = vrot.slane %v226, %v324
      %v326 = vlaneseq
      %v327 = vshrl.u32 %v326, 7
      %v328 = vsub.s32 3, %v327
      %v329 = vrot.slane %v226, %v328
      %v330 = vlaneseq
      %v331 = vshrl.u32 %v330, 7
      %v332 = vsub.s32 4, %v331
      %v333 = vrot.slane %v226, %v332
      %v334 = vlaneseq
      %v335 = vshrl.u32 %v334, 7
      %v336 = vsub.s32 5, %v335
      %v337 = vrot.slane %v226, %v336
      %v338 = vlaneseq
      %v339 = vshrl.u32 %v338, 7
      %v340 = vsub.s32 6, %v339
      %v341 = vrot.slane %v226, %v340
      %v342 = vlaneseq
      %v343 = vshrl.u32 %v342, 7
      %v344 = vsub.s32 7, %v343
      %v345 = vrot.slane %v226, %v344
      %v346 = vlaneseq
      %v347 = vshrl.u32 %v346, 7
      %v348 = vsub.s32 0, %v347
      %v349 = vrot.slane %v229, %v348
      %v350 = vlaneseq
      %v351 = vshrl.u32 %v350, 7
      %v352 = vsub.s32 1, %v351
      %v353 = vrot.slane %v229, %v352
      %v354 = vlaneseq
      %v355 = vshrl.u32 %v354, 7
      %v356 = vsub.s32 2, %v355
      %v357 = vrot.slane %v229, %v356
      %v358 = vlaneseq
      %v359 = vshrl.u32 %v358, 7
      %v360 = vsub.s32 3, %v359
      %v361 = vrot.slane %v229, %v360
      %v362 = vlaneseq
      %v363 = vshrl.u32 %v362, 7
      %v364 = vsub.s32 4, %v363
      %v365 = vrot.slane %v229, %v364
      %v366 = vlaneseq
      %v367 = vshrl.u32 %v366, 7
      %v368 = vsub.s32 5, %v367
      %v369 = vrot.slane %v229, %v368
      %v370 = vlaneseq
      %v371 = vshrl.u32 %v370, 7
      %v372 = vsub.s32 6, %v371
      %v373 = vrot.slane %v229, %v372
      %v374 = vlaneseq
      %v375 = vshrl.u32 %v374, 7
      %v376 = vsub.s32 7, %v375
      %v377 = vrot.slane %v229, %v376
      %v378 = vlaneseq
      %v379 = vshrl.u32 %v378, 7
      %v380 = vsub.s32 0, %v379
      %v381 = vrot.slane %v232, %v380
      %v382 = vlaneseq
      %v383 = vshrl.u32 %v382, 7
      %v384 = vsub.s32 1, %v383
      %v385 = vrot.slane %v232, %v384
      %v386 = vlaneseq
      %v387 = vshrl.u32 %v386, 7
      %v388 = vsub.s32 2, %v387
      %v389 = vrot.slane %v232, %v388
      %v390 = vlaneseq
      %v391 = vshrl.u32 %v390, 7
      %v392 = vsub.s32 3, %v391
      %v393 = vrot.slane %v232, %v392
      %v394 = vlaneseq
      %v395 = vshrl.u32 %v394, 7
      %v396 = vsub.s32 4, %v395
      %v397 = vrot.slane %v232, %v396
      %v398 = vlaneseq
      %v399 = vshrl.u32 %v398, 7
      %v400 = vsub.s32 5, %v399
      %v401 = vrot.slane %v232, %v400
      %v402 = vlaneseq
      %v403 = vshrl.u32 %v402, 7
      %v404 = vsub.s32 6, %v403
      %v405 = vrot.slane %v232, %v404
      %v406 = vlaneseq
      %v407 = vshrl.u32 %v406, 7
      %v408 = vsub.s32 7, %v407
      %v409 = vrot.slane %v232, %v408
      %v410 = vlaneseq
      %v411 = vshrl.u32 %v410, 7
      %v412 = vsub.s32 0, %v411
      %v413 = vrot.slane %v235, %v412
      %v414 = vlaneseq
      %v415 = vshrl.u32 %v414, 7
      %v416 = vsub.s32 1, %v415
      %v417 = vrot.slane %v235, %v416
      %v418 = vlaneseq
      %v419 = vshrl.u32 %v418, 7
      %v420 = vsub.s32 2, %v419
      %v421 = vrot.slane %v235, %v420
      %v422 = vlaneseq
      %v423 = vshrl.u32 %v422, 7
      %v424 = vsub.s32 3, %v423
      %v425 = vrot.slane %v235, %v424
      %v426 = vlaneseq
      %v427 = vshrl.u32 %v426, 7
      %v428 = vsub.s32 4, %v427
      %v429 = vrot.slane %v235, %v428
      %v430 = vlaneseq
      %v431 = vshrl.u32 %v430, 7
      %v432 = vsub.s32 5, %v431
      %v433 = vrot.slane %v235, %v432
      %v434 = vlaneseq
      %v435 = vshrl.u32 %v434, 7
      %v436 = vsub.s32 6, %v435
      %v437 = vrot.slane %v235, %v436
      %v438 = vlaneseq
      %v439 = vshrl.u32 %v438, 7
      %v440 = vsub.s32 7, %v439
      %v441 = vrot.slane %v235, %v440
      %v442 = vlaneseq
      %v443 = vshrl.u32 %v442, 7
      %v444 = vsub.s32 0, %v443
      %v445 = vrot.slane %v238, %v444
      %v446 = vlaneseq
      %v447 = vshrl.u32 %v446, 7
      %v448 = vsub.s32 1, %v447
      %v449 = vrot.slane %v238, %v448
      %v450 = vlaneseq
      %v451 = vshrl.u32 %v450, 7
      %v452 = vsub.s32 2, %v451
      %v453 = vrot.slane %v238, %v452
      %v454 = vlaneseq
      %v455 = vshrl.u32 %v454, 7
      %v456 = vsub.s32 3, %v455
      %v457 = vrot.slane %v238, %v456
      %v458 = vlaneseq
      %v459 = vshrl.u32 %v458, 7
      %v460 = vsub.s32 4, %v459
      %v461 = vrot.slane %v238, %v460
      %v462 = vlaneseq
      %v463 = vshrl.u32 %v462, 7
      %v464 = vsub.s32 5, %v463
      %v465 = vrot.slane %v238, %v464
      %v466 = vlaneseq
      %v467 = vshrl.u32 %v466, 7
      %v468 = vsub.s32 6, %v467
      %v469 = vrot.slane %v238, %v468
      %v470 = vlaneseq
      %v471 = vshrl.u32 %v470, 7
      %v472 = vsub.s32 7, %v471
      %v473 = vrot.slane %v238, %v472
      %v474 = vlaneseq
      %v475 = vshrl.u32 %v474, 7
      %v476 = vsub.s32 0, %v475
      %v477 = vrot.slane %v241, %v476
      %v478 = vlaneseq
      %v479 = vshrl.u32 %v478, 7
      %v480 = vsub.s32 1, %v479
      %v481 = vrot.slane %v241, %v480
      %v482 = vlaneseq
      %v483 = vshrl.u32 %v482, 7
      %v484 = vsub.s32 2, %v483
      %v485 = vrot.slane %v241, %v484
      %v486 = vlaneseq
      %v487 = vshrl.u32 %v486, 7
      %v488 = vsub.s32 3, %v487
      %v489 = vrot.slane %v241, %v488
      %v490 = vlaneseq
      %v491 = vshrl.u32 %v490, 7
      %v492 = vsub.s32 4, %v491
      %v493 = vrot.slane %v241, %v492
      %v494 = vlaneseq
      %v495 = vshrl.u32 %v494, 7
      %v496 = vsub.s32 5, %v495
      %v497 = vrot.slane %v241, %v496
      %v498 = vlaneseq
      %v499 = vshrl.u32 %v498, 7
      %v500 = vsub.s32 6, %v499
      %v501 = vrot.slane %v241, %v500
      %v502 = vlaneseq
      %v503 = vshrl.u32 %v502, 7
      %v504 = vsub.s32 7, %v503
      %v505 = vrot.slane %v241, %v504
      %v506 = vcombine.low %v253, %v257
      %v507 = vcombine.low %v261, %v265
      %v508 = vcombine.low %v269, %v273
      %v509 = vcombine.low %v277, %v281
      %v511 = vunpack.c.l.s4 1966171168
      %v512 = vunpack.c.0.s8 %v511
      %v513 = vlaneseq
      %v514 = vshrl.u32 %v513, 7
      %v515 = vsub.s32 %v512, %v514
      %v516 = vrot.slane %v506, %v515
      %v518 = vunpack.c.l.s4 1966171168
      %v519 = vunpack.c.0.s8 %v518
      %v520 = vlaneseq
      %v521 = vshrl.u32 %v520, 7
      %v522 = vsub.s32 %v519, %v521
      %v523 = vrot.slane %v507, %v522
      %v525 = vunpack.c.l.s4 1966171168
      %v526 = vunpack.c.0.s8 %v525
      %v527 = vlaneseq
      %v528 = vshrl.u32 %v527, 7
      %v529 = vsub.s32 %v526, %v528
      %v530 = vrot.slane %v508, %v529
      %v532 = vunpack.c.l.s4 1966171168
      %v533 = vunpack.c.0.s8 %v532
      %v534 = vlaneseq
      %v535 = vshrl.u32 %v534, 7
      %v536 = vsub.s32 %v533, %v535
      %v537 = vrot.slane %v509, %v536
      %v538 = vcombine.low %v516, %v523
      %v539 = vcombine.low %v530, %v537
      %v541 = vunpack.c.l.s4 1966171168
      %v542 = vunpack.c.0.s8 %v541
      %v543 = vlaneseq
      %v544 = vshrl.u32 %v543, 7
      %v545 = vsub.s32 %v542, %v544
      %v546 = vrot.slane %v538, %v545
      %v548 = vunpack.c.l.s4 1966171168
      %v549 = vunpack.c.0.s8 %v548
      %v550 = vlaneseq
      %v551 = vshrl.u32 %v550, 7
      %v552 = vsub.s32 %v549, %v551
      %v553 = vrot.slane %v539, %v552
      %v554 = vcombine.low %v546, %v553
      %v555 = vcombine.low %v285, %v289
      %v556 = vcombine.low %v293, %v297
      %v557 = vcombine.low %v301, %v305
      %v558 = vcombine.low %v309, %v313
      %v560 = vunpack.c.l.s4 1966171168
      %v561 = vunpack.c.0.s8 %v560
      %v562 = vlaneseq
      %v563 = vshrl.u32 %v562, 7
      %v564 = vsub.s32 %v561, %v563
      %v565 = vrot.slane %v555, %v564
      %v567 = vunpack.c.l.s4 1966171168
      %v568 = vunpack.c.0.s8 %v567
      %v569 = vlaneseq
      %v570 = vshrl.u32 %v569, 7
      %v571 = vsub.s32 %v568, %v570
      %v572 = vrot.slane %v556, %v571
      %v574 = vunpack.c.l.s4 1966171168
      %v575 = vunpack.c.0.s8 %v574
      %v576 = vlaneseq
      %v577 = vshrl.u32 %v576, 7
      %v578 = vsub.s32 %v575, %v577
      %v579 = vrot.slane %v557, %v578
      %v581 = vunpack.c.l.s4 1966171168
      %v582 = vunpack.c.0.s8 %v581
      %v583 = vlaneseq
      %v584 = vshrl.u32 %v583, 7
      %v585 = vsub.s32 %v582, %v584
      %v586 = vrot.slane %v558, %v585
      %v587 = vcombine.low %v565, %v572
      %v588 = vcombine.low %v579, %v586
      %v590 = vunpack.c.l.s4 1966171168
      %v591 = vunpack.c.0.s8 %v590
      %v592 = vlaneseq
      %v593 = vshrl.u32 %v592, 7
      %v594 = vsub.s32 %v591, %v593
      %v595 = vrot.slane %v587, %v594
      %v597 = vunpack.c.l.s4 1966171168
      %v598 = vunpack.c.0.s8 %v597
      %v599 = vlaneseq
      %v600 = vshrl.u32 %v599, 7
      %v601 = vsub.s32 %v598, %v600
      %v602 = vrot.slane %v588, %v601
      %v603 = vcombine.low %v595, %v602
      %v604 = vcombine.low %v317, %v321
      %v605 = vcombine.low %v325, %v329
      %v606 = vcombine.low %v333, %v337
      %v607 = vcombine.low %v341, %v345
      %v609 = vunpack.c.l.s4 1966171168
      %v610 = vunpack.c.0.s8 %v609
      %v611 = vlaneseq
      %v612 = vshrl.u32 %v611, 7
      %v613 = vsub.s32 %v610, %v612
      %v614 = vrot.slane %v604, %v613
      %v616 = vunpack.c.l.s4 1966171168
      %v617 = vunpack.c.0.s8 %v616
      %v618 = vlaneseq
      %v619 = vshrl.u32 %v618, 7
      %v620 = vsub.s32 %v617, %v619
      %v621 = vrot.slane %v605, %v620
      %v623 = vunpack.c.l.s4 1966171168
      %v624 = vunpack.c.0.s8 %v623
      %v625 = vlaneseq
      %v626 = vshrl.u32 %v625, 7
      %v627 = vsub.s32 %v624, %v626
      %v628 = vrot.slane %v606, %v627
      %v630 = vunpack.c.l.s4 1966171168
      %v631 = vunpack.c.0.s8 %v630
      %v632 = vlaneseq
      %v633 = vshrl.u32 %v632, 7
      %v634 = vsub.s32 %v631, %v633
      %v635 = vrot.slane %v607, %v634
      %v636 = vcombine.low %v614, %v621
      %v637 = vcombine.low %v628, %v635
      %v639 = vunpack.c.l.s4 1966171168
      %v640 = vunpack.c.0.s8 %v639
      %v641 = vlaneseq
      %v642 = vshrl.u32 %v641, 7
      %v643 = vsub.s32 %v640, %v642
      %v644 = vrot.slane %v636, %v643
      %v646 = vunpack.c.l.s4 1966171168
      %v647 = vunpack.c.0.s8 %v646
      %v648 = vlaneseq
      %v649 = vshrl.u32 %v648, 7
      %v650 = vsub.s32 %v647, %v649
      %v651 = vrot.slane %v637, %v650
      %v652 = vcombine.low %v644, %v651
      %v653 = vcombine.low %v349, %v353
      %v654 = vcombine.low %v357, %v361
      %v655 = vcombine.low %v365, %v369
      %v656 = vcombine.low %v373, %v377
      %v658 = vunpack.c.l.s4 1966171168
      %v659 = vunpack.c.0.s8 %v658
      %v660 = vlaneseq
      %v661 = vshrl.u32 %v660, 7
      %v662 = vsub.s32 %v659, %v661
      %v663 = vrot.slane %v653, %v662
      %v665 = vunpack.c.l.s4 1966171168
      %v666 = vunpack.c.0.s8 %v665
      %v667 = vlaneseq
      %v668 = vshrl.u32 %v667, 7
      %v669 = vsub.s32 %v666, %v668
      %v670 = vrot.slane %v654, %v669
      %v672 = vunpack.c.l.s4 1966171168
      %v673 = vunpack.c.0.s8 %v672
      %v674 = vlaneseq
      %v675 = vshrl.u32 %v674, 7
      %v676 = vsub.s32 %v673, %v675
      %v677 = vrot.slane %v655, %v676
      %v679 = vunpack.c.l.s4 1966171168
      %v680 = vunpack.c.0.s8 %v679
      %v681 = vlaneseq
      %v682 = vshrl.u32 %v681, 7
      %v683 = vsub.s32 %v680, %v682
      %v684 = vrot.slane %v656, %v683
      %v685 = vcombine.low %v663, %v670
      %v686 = vcombine.low %v677, %v684
      %v688 = vunpack.c.l.s4 1966171168
      %v689 = vunpack.c.0.s8 %v688
      %v690 = vlaneseq
      %v691 = vshrl.u32 %v690, 7
      %v692 = vsub.s32 %v689, %v691
      %v693 = vrot.slane %v685, %v692
      %v695 = vunpack.c.l.s4 1966171168
      %v696 = vunpack.c.0.s8 %v695
      %v697 = vlaneseq
      %v698 = vshrl.u32 %v697, 7
      %v699 = vsub.s32 %v696, %v698
      %v700 = vrot.slane %v686, %v699
      %v701 = vcombine.low %v693, %v700
      %v702 = vcombine.low %v381, %v385
      %v703 = vcombine.low %v389, %v393
      %v704 = vcombine.low %v397, %v401
      %v705 = vcombine.low %v405, %v409
      %v707 = vunpack.c.l.s4 1966171168
      %v708 = vunpack.c.0.s8 %v707
      %v709 = vlaneseq
      %v710 = vshrl.u32 %v709, 7
      %v711 = vsub.s32 %v708, %v710
      %v712 = vrot.slane %v702, %v711
      %v714 = vunpack.c.l.s4 1966171168
      %v715 = vunpack.c.0.s8 %v714
      %v716 = vlaneseq
      %v717 = vshrl.u32 %v716, 7
      %v718 = vsub.s32 %v715, %v717
      %v719 = vrot.slane %v703, %v718
      %v721 = vunpack.c.l.s4 1966171168
      %v722 = vunpack.c.0.s8 %v721
      %v723 = vlaneseq
      %v724 = vshrl.u32 %v723, 7
      %v725 = vsub.s32 %v722, %v724
      %v726 = vrot.slane %v704, %v725
      %v728 = vunpack.c.l.s4 1966171168
      %v729 = vunpack.c.0.s8 %v728
      %v730 = vlaneseq
      %v731 = vshrl.u32 %v730, 7
      %v732 = vsub.s32 %v729, %v731
      %v733 = vrot.slane %v705, %v732
      %v734 = vcombine.low %v712, %v719
      %v735 = vcombine.low %v726, %v733
      %v737 = vunpack.c.l.s4 1966171168
      %v738 = vunpack.c.0.s8 %v737
      %v739 = vlaneseq
      %v740 = vshrl.u32 %v739, 7
      %v741 = vsub.s32 %v738, %v740
      %v742 = vrot.slane %v734, %v741
      %v744 = vunpack.c.l.s4 1966171168
      %v745 = vunpack.c.0.s8 %v744
      %v746 = vlaneseq
      %v747 = vshrl.u32 %v746, 7
      %v748 = vsub.s32 %v745, %v747
      %v749 = vrot.slane %v735, %v748
      %v750 = vcombine.low %v742, %v749
      %v751 = vcombine.low %v413, %v417
      %v752 = vcombine.low %v421, %v425
      %v753 = vcombine.low %v429, %v433
      %v754 = vcombine.low %v437, %v441
      %v756 = vunpack.c.l.s4 1966171168
      %v757 = vunpack.c.0.s8 %v756
      %v758 = vlaneseq
      %v759 = vshrl.u32 %v758, 7
      %v760 = vsub.s32 %v757, %v759
      %v761 = vrot.slane %v751, %v760
      %v763 = vunpack.c.l.s4 1966171168
      %v764 = vunpack.c.0.s8 %v763
      %v765 = vlaneseq
      %v766 = vshrl.u32 %v765, 7
      %v767 = vsub.s32 %v764, %v766
      %v768 = vrot.slane %v752, %v767
      %v770 = vunpack.c.l.s4 1966171168
      %v771 = vunpack.c.0.s8 %v770
      %v772 = vlaneseq
      %v773 = vshrl.u32 %v772, 7
      %v774 = vsub.s32 %v771, %v773
      %v775 = vrot.slane %v753, %v774
      %v777 = vunpack.c.l.s4 1966171168
      %v778 = vunpack.c.0.s8 %v777
      %v779 = vlaneseq
      %v780 = vshrl.u32 %v779, 7
      %v781 = vsub.s32 %v778, %v780
      %v782 = vrot.slane %v754, %v781
      %v783 = vcombine.low %v761, %v768
      %v784 = vcombine.low %v775, %v782
      %v786 = vunpack.c.l.s4 1966171168
      %v787 = vunpack.c.0.s8 %v786
      %v788 = vlaneseq
      %v789 = vshrl.u32 %v788, 7
      %v790 = vsub.s32 %v787, %v789
      %v791 = vrot.slane %v783, %v790
      %v793 = vunpack.c.l.s4 1966171168
      %v794 = vunpack.c.0.s8 %v793
      %v795 = vlaneseq
      %v796 = vshrl.u32 %v795, 7
      %v797 = vsub.s32 %v794, %v796
      %v798 = vrot.slane %v784, %v797
      %v799 = vcombine.low %v791, %v798
      %v800 = vcombine.low %v445, %v449
      %v801 = vcombine.low %v453, %v457
      %v802 = vcombine.low %v461, %v465
      %v803 = vcombine.low %v469, %v473
      %v805 = vunpack.c.l.s4 1966171168
      %v806 = vunpack.c.0.s8 %v805
      %v807 = vlaneseq
      %v808 = vshrl.u32 %v807, 7
      %v809 = vsub.s32 %v806, %v808
      %v810 = vrot.slane %v800, %v809
      %v812 = vunpack.c.l.s4 1966171168
      %v813 = vunpack.c.0.s8 %v812
      %v814 = vlaneseq
      %v815 = vshrl.u32 %v814, 7
      %v816 = vsub.s32 %v813, %v815
      %v817 = vrot.slane %v801, %v816
      %v819 = vunpack.c.l.s4 1966171168
      %v820 = vunpack.c.0.s8 %v819
      %v821 = vlaneseq
      %v822 = vshrl.u32 %v821, 7
      %v823 = vsub.s32 %v820, %v822
      %v824 = vrot.slane %v802, %v823
      %v826 = vunpack.c.l.s4 1966171168
      %v827 = vunpack.c.0.s8 %v826
      %v828 = vlaneseq
      %v829 = vshrl.u32 %v828, 7
      %v830 = vsub.s32 %v827, %v829
      %v831 = vrot.slane %v803, %v830
      %v832 = vcombine.low %v810, %v817
      %v833 = vcombine.low %v824, %v831
      %v835 = vunpack.c.l.s4 1966171168
      %v836 = vunpack.c.0.s8 %v835
      %v837 = vlaneseq
      %v838 = vshrl.u32 %v837, 7
      %v839 = vsub.s32 %v836, %v838
      %v840 = vrot.slane %v832, %v839
      %v842 = vunpack.c.l.s4 1966171168
      %v843 = vunpack.c.0.s8 %v842
      %v844 = vlaneseq
      %v845 = vshrl.u32 %v844, 7
      %v846 = vsub.s32 %v843, %v845
      %v847 = vrot.slane %v833, %v846
      %v848 = vcombine.low %v840, %v847
      %v849 = vcombine.low %v477, %v481
      %v850 = vcombine.low %v485, %v489
      %v851 = vcombine.low %v493, %v497
      %v852 = vcombine.low %v501, %v505
      %v854 = vunpack.c.l.s4 1966171168
      %v855 = vunpack.c.0.s8 %v854
      %v856 = vlaneseq
      %v857 = vshrl.u32 %v856, 7
      %v858 = vsub.s32 %v855, %v857
      %v859 = vrot.slane %v849, %v858
      %v861 = vunpack.c.l.s4 1966171168
      %v862 = vunpack.c.0.s8 %v861
      %v863 = vlaneseq
      %v864 = vshrl.u32 %v863, 7
      %v865 = vsub.s32 %v862, %v864
      %v866 = vrot.slane %v850, %v865
      %v868 = vunpack.c.l.s4 1966171168
      %v869 = vunpack.c.0.s8 %v868
      %v870 = vlaneseq
      %v871 = vshrl.u32 %v870, 7
      %v872 = vsub.s32 %v869, %v871
      %v873 = vrot.slane %v851, %v872
      %v875 = vunpack.c.l.s4 1966171168
      %v876 = vunpack.c.0.s8 %v875
      %v877 = vlaneseq
      %v878 = vshrl.u32 %v877, 7
      %v879 = vsub.s32 %v876, %v878
      %v880 = vrot.slane %v852, %v879
      %v881 = vcombine.low %v859, %v866
      %v882 = vcombine.low %v873, %v880
      %v884 = vunpack.c.l.s4 1966171168
      %v885 = vunpack.c.0.s8 %v884
      %v886 = vlaneseq
      %v887 = vshrl.u32 %v886, 7
      %v888 = vsub.s32 %v885, %v887
      %v889 = vrot.slane %v881, %v888
      %v891 = vunpack.c.l.s4 1966171168
      %v892 = vunpack.c.0.s8 %v891
      %v893 = vlaneseq
      %v894 = vshrl.u32 %v893, 7
      %v895 = vsub.s32 %v892, %v894
      %v896 = vrot.slane %v882, %v895
      %v897 = vcombine.low %v889, %v896
      %898 = vset.pattern.permute.xlu0 0
      %899 = vperm.xlu0 %898, %v554
      %v900 = vpop.permute.xlu0 %899
      %901 = vset.pattern.permute.xlu0 0
      %902 = vperm.xlu0 %901, %v603
      %v903 = vpop.permute.xlu0 %902
      %904 = vset.pattern.permute.xlu0 0
      %905 = vperm.xlu0 %904, %v652
      %v906 = vpop.permute.xlu0 %905
      %907 = vset.pattern.permute.xlu0 0
      %908 = vperm.xlu0 %907, %v701
      %v909 = vpop.permute.xlu0 %908
      %910 = vset.pattern.permute.xlu0 0
      %911 = vperm.xlu0 %910, %v750
      %v912 = vpop.permute.xlu0 %911
      %913 = vset.pattern.permute.xlu0 0
      %914 = vperm.xlu0 %913, %v799
      %v915 = vpop.permute.xlu0 %914
      %916 = vset.pattern.permute.xlu0 0
      %917 = vperm.xlu0 %916, %v848
      %v918 = vpop.permute.xlu0 %917
      %919 = vset.pattern.permute.xlu0 0
      %920 = vperm.xlu0 %919, %v897
      %v921 = vpop.permute.xlu0 %920
      %v922 = vlaneseq
      %v923 = vand.u32 %v922, 127
      %v924 = vlaneseq
      %v925 = vshrl.u32 %v924, 7
      %v926 = vsub.s32 %v923, %v925
      %v927 = vrot.slane %v900, %v926
      %v928 = vadd.s32 %v923, 4294967288
      %v929 = vlaneseq
      %v930 = vshrl.u32 %v929, 7
      %v931 = vsub.s32 %v928, %v930
      %v932 = vrot.slane %v903, %v931
      %vm933 = vcmask 130112
      %v934 = vsel %vm933, %v932, %v927
      %v935 = vadd.s32 %v923, 4294967280
      %v936 = vlaneseq
      %v937 = vshrl.u32 %v936, 7
      %v938 = vsub.s32 %v935, %v937
      %v939 = vrot.slane %v906, %v938
      %vm940 = vcmask 195712
      %v941 = vsel %vm940, %v939, %v934
      %v942 = vadd.s32 %v923, 4294967272
      %v943 = vlaneseq
      %v944 = vshrl.u32 %v943, 7
      %v945 = vsub.s32 %v942, %v944
      %v946 = vrot.slane %v909, %v945
      %vm947 = vcmask 261312
      %v948 = vsel %vm947, %v946, %v941
      %v949 = vadd.s32 %v923, 4294967264
      %v950 = vlaneseq
      %v951 = vshrl.u32 %v950, 7
      %v952 = vsub.s32 %v949, %v951
      %v953 = vrot.slane %v912, %v952
      %vm954 = vcmask 326912
      %v955 = vsel %vm954, %v953, %v948
      %v956 = vadd.s32 %v923, 4294967256
      %v957 = vlaneseq
      %v958 = vshrl.u32 %v957, 7
      %v959 = vsub.s32 %v956, %v958
      %v960 = vrot.slane %v915, %v959
      %vm961 = vcmask 392512
      %v962 = vsel %vm961, %v960, %v955
      %v963 = vadd.s32 %v923, 4294967248
      %v964 = vlaneseq
      %v965 = vshrl.u32 %v964, 7
      %v966 = vsub.s32 %v963, %v965
      %v967 = vrot.slane %v918, %v966
      %vm968 = vcmask 458112
      %v969 = vsel %vm968, %v967, %v962
      %v970 = vadd.s32 %v923, 4294967240
      %v971 = vlaneseq
      %v972 = vshrl.u32 %v971, 7
      %v973 = vsub.s32 %v970, %v972
      %v974 = vrot.slane %v921, %v973
      %vm975 = vcmask 523712
      %v976 = vsel %vm975, %v974, %v969
      %v978 = vunpack.c.l.s4 1966171168
      %v979 = vunpack.c.0.s8 %v978
      %v980 = vlaneseq
      %v981 = vshrl.u32 %v980, 7
      %v982 = vsub.s32 %v979, %v981
      %v983 = vrot.slane %v976, %v982
      %v985 = vunpack.c.l.s4 1966171168
      %v986 = vunpack.c.0.s8 %v985
      %v987 = vlaneseq
      %v988 = vshrl.u32 %v987, 7
      %v989 = vsub.s32 %v986, %v988
      %v990 = vrot.slane %v983, %v989
      %v992 = vadd.f32 %v217, %v990
      %vm993 = vcmask 516096
      %994 = vst.msk [vmem:[#allocation2] sm:$0x1] %vm993, %v992
      // Predicated region
      $region37: #{se_layer.2} parent=31 // pred_check
        %p995 = pneg %p195
      $region38: #{se_layer.2} parent=31 // pred_check_branch
        %997 = sbr.rel (%p995) target = $region40
      $region39: #{se_layer.2} parent=31 // pred_region
        %v998 = vld [vmem:[#allocation2] sm:$0x1]
        %v999 = vmul.f32 %v998, 0.00390625
        %v1000 = vld [vmem:[%s1] sm:$0xff]
        %v1001 = vld [vmem:[%s1 + $0x8] sm:$0xff]
        %v1002 = vld [vmem:[%s1 + $0x10] sm:$0xff]
        %v1003 = vld [vmem:[%s1 + $0x18] sm:$0xff]
        %v1004 = vld [vmem:[%s1 + $0x20] sm:$0xff]
        %v1005 = vld [vmem:[%s1 + $0x28] sm:$0xff]
        %v1006 = vld [vmem:[%s1 + $0x30] sm:$0xff]
        %v1007 = vld [vmem:[%s1 + $0x38] sm:$0xff]
        %vm1008 = vcmask 523264
        %v1010 = vsel %vm1008, %v999, 0
        %1012 = vmatprep.subr.mxu0 0.0
        %1013 = vmatpush1.msra.mxu0 %v1000
        %1014 = vmatprep.subr.mxu0 0.0
        %1015 = vmatpush1.msra.mxu0 %v1001
        %1016 = vmatprep.subr.mxu0 0.0
        %1017 = vmatpush1.msra.mxu0 %v1002
        %1018 = vmatprep.subr.mxu0 0.0
        %1019 = vmatpush1.msra.mxu0 %v1003
        %1020 = vmatprep.subr.mxu0 0.0
        %1021 = vmatpush1.msra.mxu0 %v1004
        %1022 = vmatprep.subr.mxu0 0.0
        %1023 = vmatpush1.msra.mxu0 %v1005
        %1024 = vmatprep.subr.mxu0 0.0
        %1025 = vmatpush1.msra.mxu0 %v1006
        %1026 = vmatprep.subr.mxu0 0.0
        %1027 = vmatpush1.msra.mxu0 %v1007
        %1028 = vmatprep.subr.mxu0 0.0
        %1029 = vmatpush1.msra.mxu0 0.0
        %1030 = vmatprep.subr.mxu0 0.0
        %1031 = vmatpush1.msra.mxu0 0.0
        %1032 = vmatprep.subr.mxu0 0.0
        %1033 = vmatpush1.msra.mxu0 0.0
        %1034 = vmatprep.subr.mxu0 0.0
        %1035 = vmatpush1.msra.mxu0 0.0
        %1036 = vmatprep.subr.mxu0 0.0
        %1037 = vmatpush1.msra.mxu0 0.0
        %1038 = vmatprep.subr.mxu0 0.0
        %1039 = vmatpush1.msra.mxu0 0.0
        %1040 = vmatprep.subr.mxu0 0.0
        %1041 = vmatpush1.msra.mxu0 0.0
        %1042 = vmatprep.subr.mxu0 0.0
        %1043 = vmatpush1.msra.mxu0 0.0
        %1044 = vmatprep.subr.mxu0 0.0
        %1045 = vmatpush1.msra.mxu0 0.0
        %1046 = vmatprep.subr.mxu0 0.0
        %1047 = vmatpush1.msra.mxu0 0.0
        %1048 = vmatprep.subr.mxu0 0.0
        %1049 = vmatpush1.msra.mxu0 0.0
        %1050 = vmatprep.subr.mxu0 0.0
        %1051 = vmatpush1.msra.mxu0 0.0
        %1052 = vmatprep.subr.mxu0 0.0
        %1053 = vmatpush1.msra.mxu0 0.0
        %1054 = vmatprep.subr.mxu0 0.0
        %1055 = vmatpush1.msra.mxu0 0.0
        %1056 = vmatprep.subr.mxu0 0.0
        %1057 = vmatpush1.msra.mxu0 0.0
        %1058 = vmatprep.subr.mxu0 0.0
        %1059 = vmatpush1.msra.mxu0 0.0
        %1060 = vmatprep.subr.mxu0 0.0
        %1061 = vmatpush1.msra.mxu0 0.0
        %1062 = vmatprep.subr.mxu0 0.0
        %1063 = vmatpush1.msra.mxu0 0.0
        %1064 = vmatprep.subr.mxu0 0.0
        %1065 = vmatpush1.msra.mxu0 0.0
        %1066 = vmatprep.subr.mxu0 0.0
        %1067 = vmatpush1.msra.mxu0 0.0
        %1068 = vmatprep.subr.mxu0 0.0
        %1069 = vmatpush1.msra.mxu0 0.0
        %1070 = vmatprep.subr.mxu0 0.0
        %1071 = vmatpush1.msra.mxu0 0.0
        %1072 = vmatprep.subr.mxu0 0.0
        %1073 = vmatpush1.msra.mxu0 0.0
        %1074 = vmatprep.subr.mxu0 0.0
        %1075 = vmatpush1.msra.mxu0 0.0
        %1076 = vmatprep.mubr.f32.mxu0 0.0
        %1077 = vmatmul.mubr.f32.gmra.mrb[0].mxu0 %v1010
        %v1078 = vpop.f32.mrb[0].mxu0
        %v1079 = vadd.f32 0.0, %v1078
        %v1080 = vpop.f32.mrb[0].mxu0
        %1081 = vdwg.mxu0
        %v1082 = vmax.f32 %v1079, 0.0
        %v1083 = vld [vmem:[%s2] sm:$0xf]
        %vm1084 = vcmask 31744
        %v1086 = vsel %vm1084, %v1082, 0
        %vm1088 = vcmask 1043456
        %v1090 = vsel %vm1088, %v1083, 0
        %1092 = vmatprep.subr.mxu0 0.0
        %1093 = vmatpush1.msra.mxu0 %v1090
        %1094 = vmatprep.subr.mxu0 0.0
        %1095 = vmatpush1.msra.mxu0 0.0
        %1096 = vmatprep.subr.mxu0 0.0
        %1097 = vmatpush1.msra.mxu0 0.0
        %1098 = vmatprep.subr.mxu0 0.0
        %1099 = vmatpush1.msra.mxu0 0.0
        %1100 = vmatprep.subr.mxu0 0.0
        %1101 = vmatpush1.msra.mxu0 0.0
        %1102 = vmatprep.subr.mxu0 0.0
        %1103 = vmatpush1.msra.mxu0 0.0
        %1104 = vmatprep.subr.mxu0 0.0
        %1105 = vmatpush1.msra.mxu0 0.0
        %1106 = vmatprep.subr.mxu0 0.0
        %1107 = vmatpush1.msra.mxu0 0.0
        %1108 = vmatprep.subr.mxu0 0.0
        %1109 = vmatpush1.msra.mxu0 0.0
        %1110 = vmatprep.subr.mxu0 0.0
        %1111 = vmatpush1.msra.mxu0 0.0
        %1112 = vmatprep.subr.mxu0 0.0
        %1113 = vmatpush1.msra.mxu0 0.0
        %1114 = vmatprep.subr.mxu0 0.0
        %1115 = vmatpush1.msra.mxu0 0.0
        %1116 = vmatprep.subr.mxu0 0.0
        %1117 = vmatpush1.msra.mxu0 0.0
        %1118 = vmatprep.subr.mxu0 0.0
        %1119 = vmatpush1.msra.mxu0 0.0
        %1120 = vmatprep.subr.mxu0 0.0
        %1121 = vmatpush1.msra.mxu0 0.0
        %1122 = vmatprep.subr.mxu0 0.0
        %1123 = vmatpush1.msra.mxu0 0.0
        %1124 = vmatprep.subr.mxu0 0.0
        %1125 = vmatpush1.msra.mxu0 0.0
        %1126 = vmatprep.subr.mxu0 0.0
        %1127 = vmatpush1.msra.mxu0 0.0
        %1128 = vmatprep.subr.mxu0 0.0
        %1129 = vmatpush1.msra.mxu0 0.0
        %1130 = vmatprep.subr.mxu0 0.0
        %1131 = vmatpush1.msra.mxu0 0.0
        %1132 = vmatprep.subr.mxu0 0.0
        %1133 = vmatpush1.msra.mxu0 0.0
        %1134 = vmatprep.subr.mxu0 0.0
        %1135 = vmatpush1.msra.mxu0 0.0
        %1136 = vmatprep.subr.mxu0 0.0
        %1137 = vmatpush1.msra.mxu0 0.0
        %1138 = vmatprep.subr.mxu0 0.0
        %1139 = vmatpush1.msra.mxu0 0.0
        %1140 = vmatprep.subr.mxu0 0.0
        %1141 = vmatpush1.msra.mxu0 0.0
        %1142 = vmatprep.subr.mxu0 0.0
        %1143 = vmatpush1.msra.mxu0 0.0
        %1144 = vmatprep.subr.mxu0 0.0
        %1145 = vmatpush1.msra.mxu0 0.0
        %1146 = vmatprep.subr.mxu0 0.0
        %1147 = vmatpush1.msra.mxu0 0.0
        %1148 = vmatprep.subr.mxu0 0.0
        %1149 = vmatpush1.msra.mxu0 0.0
        %1150 = vmatprep.subr.mxu0 0.0
        %1151 = vmatpush1.msra.mxu0 0.0
        %1152 = vmatprep.subr.mxu0 0.0
        %1153 = vmatpush1.msra.mxu0 0.0
        %1154 = vmatprep.subr.mxu0 0.0
        %1155 = vmatpush1.msra.mxu0 0.0
        %1156 = vmatprep.mubr.f32.mxu0 0.0
        %1157 = vmatmul.mubr.f32.gmra.mrb[0].mxu0 %v1086
        %v1158 = vpop.f32.mrb[0].mxu0
        %v1159 = vadd.f32 0.0, %v1158
        %v1160 = vpop.f32.mrb[0].mxu0
        %1161 = vdwg.mxu0
        %v1162 = vxor.u32 %v1159, 2147483648
        %v1163 = vmul.f32 %v1162, 1.442695
        %v1164 = vpow.pop %v1163
        %v1165 = vadd.f32 %v1164, 1.0
        %v1166 = vrcp.pop %v1165
        %v1167 = vmul.f32 1.0, %v1166
        %1168 = vst.msk [vmem:[%s194] sm:$0x1] %vm993, %v1167
      $region40: #{se_layer.2} parent=31 // pred_fallthru
        _
      %p1169 = scmp.lt.s32.totalorder %s18, 1
      %s1170 = scalar_select %p1169, %s18, 1
      %s1171 = scalar_lea.vmem %s3, %s1170
      // Predicated region
      $region41: #{se_layer.2} parent=31 // pred_check
        %p1172 = pneg %p114
      $region42: #{se_layer.2} parent=31 // pred_check_branch
        %1174 = sbr.rel (%p1172) target = $region44
      $region43: #{se_layer.2} parent=31 // pred_region
        _
      $region44: #{se_layer.2} parent=31 // pred_fallthru
        _
    $region32: #{se_layer.2} parent=5 // pred_fallthru
      _
    %p1175 = scmp.le.s32.totalorder 2, %s9
    // Predicated region
    $region45: #{se_layer.2} parent=5 // pred_check
      %p1176 = pneg %p1175
    $region46: #{se_layer.2} parent=5 // pred_check_branch
      %1178 = sbr.rel (%p1176) target = $region48
    $region47: #{se_layer.2} parent=5 // pred_region
      %s1179 = ssub.s32 %s9, 2
      // Predicated region
      $region49: #{se_layer.2} parent=47 // pred_check
        %p1180 = pneg %p120
      $region50: #{se_layer.2} parent=47 // pred_check_branch
        %1182 = sbr.rel (%p1180) target = $region52
      $region51: #{se_layer.2} parent=47 // pred_region
        %p1183 = scmp.lt.s32.totalorder %s20, 1
        %s1184 = scalar_select %p1183, %s20, 1
        %s1185 = scalar_lea.vmem %s3, %s1184
      $region52: #{se_layer.2} parent=47 // pred_fallthru
        _
    $region48: #{se_layer.2} parent=5 // pred_fallthru
      _
  $region6: #{se_layer.2} parent=0 // loop_footer
    %s13 = sadd.s32 1, %s9
  $region7: #{se_layer.2} parent=0 // loop_footer_branch
    %8 = sbr.rel target = $region3
  $region8: #{se_layer.2} parent=0 // loop_exit
    _

</llo_original>
